<compile_context>
chip_gen: v7x
topology: tpu7x:2x2x1
jax: 0.10.0
libtpu: 0.0.40
codegen_flags: <defaults>
</compile_context>

<pallas_src>
import numpy as np
import jax
import jax.numpy as jnp
from jax.experimental import pallas as pl
from jax.experimental.pallas import tpu as pltpu


def _round_up(x, m):
    return (x + m - 1) // m * m


# ---------------------------------------------------------------------------
# Kernel: avg-pool (VPU adds over window axis) -> Linear+ReLU -> Linear (MXU)
#   x_ref    : (KWIN, TB, F)  f32   window-major input slab
#   w1_ref   : (F, PAD)       bf16  first Linear weight (zero-padded cols)
#   w2_ref   : (PAD, PAD)     bf16  second Linear weight (zero-padded rows/cols)
#   bias_ref : (2, PAD)       f32   row 0 = b1 (padded), row 1 = b2 (padded)
#   o_ref    : (TB, PAD)      f32   lane-dense output tile
# ---------------------------------------------------------------------------
def ff_classifier_kernel(x_ref, w1_ref, w2_ref, bias_ref, o_ref):
    kwin = x_ref.shape[0]

    # AdaptiveAvgPool2d((4,4)): mean over the kh*kw window elements.
    # Leading-axis reduction = (kwin-1) aligned VPU adds, no relayout.
    acc = x_ref[0]
    for e in range(1, kwin):
        acc = acc + x_ref[e]
    pooled = acc * (1.0 / kwin)                                   # (TB, F) f32

    # Linear(C*16 -> hidden) + ReLU, bf16 MXU with f32 accumulation.
    h = jnp.dot(pooled.astype(w1_ref.dtype), w1_ref[...],
                preferred_element_type=jnp.float32) + bias_ref[0:1, :]
    h = jnp.maximum(h, 0.0)

    # Linear(hidden -> n_classes), bf16 MXU with f32 accumulation.
    out = jnp.dot(h.astype(w2_ref.dtype), w2_ref[...],
                  preferred_element_type=jnp.float32) + bias_ref[1:2, :]

    o_ref[...] = out.astype(o_ref.dtype)


def ff_classifier_forward(x_nchw, W1, b1, W2, b2,
                          matmul_dtype=jnp.bfloat16, batch_tile=None):
    """FF_classifier forward (eval mode, norm_type=None).

    W1: (C*4*4, hidden), b1: (hidden,), W2: (hidden, n_classes), b2: (n_classes,)
    (weights stored input-major, i.e. transposed vs. torch nn.Linear.weight).
    """
    B, C, H, W = x_nchw.shape
    OH, OW = 4, 4
    assert H % OH == 0 and W % OW == 0, "uneven adaptive-pool windows unsupported"
    kh, kw = H // OH, W // OW
    KWIN = kh * kw
    F = C * OH * OW
    hidden = W1.shape[1]
    n_classes = W2.shape[1]

    # Pad feature dims to 128 lanes (lane-dense stores / full-width vregs) and
    # the batch to a sublane-friendly tile.
    PAD = max(_round_up(hidden, 128), _round_up(n_classes, 128))
    TB = batch_tile or min(256, _round_up(B, 8))
    B_pad = _round_up(B, TB)

    # Layout plumbing (wrapper side): (B,C,H,W) -> (kh*kw, B, C*OH*OW) so that
    # lane index = torch .view(B,-1) feature order (c*16 + oh*4 + ow) and the
    # pooling reduction runs over the leading axis inside the kernel.
    x6 = x_nchw.astype(jnp.float32).reshape(B, C, OH, kh, OW, kw)
    x_win = jnp.transpose(x6, (3, 5, 0, 1, 2, 4)).reshape(KWIN, B, F)
    x_win = jnp.pad(x_win, ((0, 0), (0, B_pad - B), (0, 0)))

    w1_p = jnp.pad(W1.astype(matmul_dtype), ((0, 0), (0, PAD - hidden)))
    w2_p = jnp.pad(W2.astype(matmul_dtype), ((0, PAD - hidden), (0, PAD - n_classes)))
    biases = jnp.stack([
        jnp.pad(b1.astype(jnp.float32), (0, PAD - hidden)),
        jnp.pad(b2.astype(jnp.float32), (0, PAD - n_classes)),
    ])                                                            # (2, PAD) f32

    flops = 2 * B_pad * (F * PAD + PAD * PAD) + B_pad * KWIN * F
    bytes_accessed = int(
        x_win.size * x_win.dtype.itemsize
        + w1_p.size * w1_p.dtype.itemsize
        + w2_p.size * w2_p.dtype.itemsize
        + biases.size * biases.dtype.itemsize
        + B_pad * PAD * 4
    )

    out_pad = pl.pallas_call(
        ff_classifier_kernel,
        out_shape=jax.ShapeDtypeStruct((B_pad, PAD), jnp.float32),
        grid_spec=pltpu.PrefetchScalarGridSpec(
            num_scalar_prefetch=0,
            grid=(B_pad // TB,),
            in_specs=[
                pl.BlockSpec((KWIN, TB, F), lambda i: (0, i, 0)),   # x tile per batch step
                pl.BlockSpec((F, PAD), lambda i: (0, 0)),           # W1, VMEM-resident
                pl.BlockSpec((PAD, PAD), lambda i: (0, 0)),         # W2, VMEM-resident
                pl.BlockSpec((2, PAD), lambda i: (0, 0)),           # biases, VMEM-resident
            ],
            out_specs=pl.BlockSpec((TB, PAD), lambda i: (i, 0)),
        ),
        compiler_params=pltpu.CompilerParams(
            dimension_semantics=("parallel",),
            vmem_limit_bytes=32 * 1024 * 1024,
        ),
        cost_estimate=pl.CostEstimate(
            flops=int(flops), transcendentals=0, bytes_accessed=bytes_accessed),
    )(x_win, w1_p, w2_p, biases)

    return out_pad[:B, :n_classes]


def reference_forward(x_nchw, W1, b1, W2, b2):
    """Pure-JAX f32 reference reproducing the PyTorch forward (eval, norm=None)."""
    B, C, H, W = x_nchw.shape
    pooled = x_nchw.reshape(B, C, 4, H // 4, 4, W // 4).mean(axis=(3, 5))  # (B,C,4,4)
    flat = pooled.reshape(B, -1)
    h = jnp.maximum(flat @ W1 + b1, 0.0)
    return h @ W2 + b2


if __name__ == "__main__":
    # FF_classifier(in_channels=4, n_classes=10, hidden_channels=32, norm_type=None)
    B, C, H, W = 2, 4, 16, 16
    n_classes = 10
    hidden = 32
    in_features = 4 * 4 * C  # avg_pool_size (4,4) * in_channels

    key = jax.random.PRNGKey(0)
    kx, k1, k2, k3, k4 = jax.random.split(key, 5)

    x = jax.random.normal(kx, (B, C, H, W), dtype=jnp.float32)

    bound1 = 1.0 / np.sqrt(in_features)
    W1 = jax.random.uniform(k1, (in_features, hidden), jnp.float32, -bound1, bound1)
    b1 = jax.random.uniform(k2, (hidden,), jnp.float32, -bound1, bound1)
    bound2 = 1.0 / np.sqrt(hidden)
    W2 = jax.random.uniform(k3, (hidden, n_classes), jnp.float32, -bound2, bound2)
    b2 = jax.random.uniform(k4, (n_classes,), jnp.float32, -bound2, bound2)

    out = ff_classifier_forward(x, W1, b1, W2, b2)
    out = jax.block_until_ready(out)

    ref = jax.block_until_ready(reference_forward(x, W1, b1, W2, b2))
    # bf16 matmuls with f32 accumulation -> relaxed tolerance vs. the f32 reference.
    np.testing.assert_allclose(np.asarray(out), np.asarray(ref), rtol=1e-2, atol=1e-2)

    print("KERNEL_OK")
</pallas_src>

<mosaic_0001>
module attributes {stable_mosaic.version = 11 : i64} {
  func.func @ff_classifier_kernel(%arg0: i32, %arg1: memref<16x8x64xf32, #tpu.memory_space<vmem>>, %arg2: memref<64x128xbf16, #tpu.memory_space<vmem>>, %arg3: memref<128x128xbf16, #tpu.memory_space<vmem>>, %arg4: memref<2x128xf32, #tpu.memory_space<vmem>>, %arg5: memref<8x128xf32, #tpu.memory_space<vmem>>) attributes {dimension_semantics = [#tpu.dimension_semantics<parallel>], iteration_bounds = array<i64: 1>, scalar_prefetch = 0 : i64, scratch_operands = 0 : i64, tpu.core_type = #tpu.core_type<tc>, window_params = [{transform_indices = @transform_0, window_bounds = array<i64: 16, 8, 64>}, {pipeline_mode = #tpu.pipeline_mode<synchronous>, transform_indices = @transform_1, window_bounds = array<i64: 64, 128>}, {pipeline_mode = #tpu.pipeline_mode<synchronous>, transform_indices = @transform_2, window_bounds = array<i64: 128, 128>}, {pipeline_mode = #tpu.pipeline_mode<synchronous>, transform_indices = @transform_3, window_bounds = array<i64: 2, 128>}, {transform_indices = @transform_4, window_bounds = array<i64: 8, 128>}]} {
    %c0 = arith.constant 0 : index
    %c0_0 = arith.constant 0 : index
    %c0_1 = arith.constant 0 : index
    %0 = vector.load %arg1[%c0, %c0_0, %c0_1] : memref<16x8x64xf32, #tpu.memory_space<vmem>>, vector<1x8x64xf32>
    %1 = vector.shape_cast %0 : vector<1x8x64xf32> to vector<8x64xf32>
    %c1 = arith.constant 1 : index
    %c0_2 = arith.constant 0 : index
    %c0_3 = arith.constant 0 : index
    %2 = vector.load %arg1[%c1, %c0_2, %c0_3] : memref<16x8x64xf32, #tpu.memory_space<vmem>>, vector<1x8x64xf32>
    %3 = vector.shape_cast %2 : vector<1x8x64xf32> to vector<8x64xf32>
    %4 = arith.addf %1, %3 : vector<8x64xf32>
    %c2 = arith.constant 2 : index
    %c0_4 = arith.constant 0 : index
    %c0_5 = arith.constant 0 : index
    %5 = vector.load %arg1[%c2, %c0_4, %c0_5] : memref<16x8x64xf32, #tpu.memory_space<vmem>>, vector<1x8x64xf32>
    %6 = vector.shape_cast %5 : vector<1x8x64xf32> to vector<8x64xf32>
    %7 = arith.addf %4, %6 : vector<8x64xf32>
    %c3 = arith.constant 3 : index
    %c0_6 = arith.constant 0 : index
    %c0_7 = arith.constant 0 : index
    %8 = vector.load %arg1[%c3, %c0_6, %c0_7] : memref<16x8x64xf32, #tpu.memory_space<vmem>>, vector<1x8x64xf32>
    %9 = vector.shape_cast %8 : vector<1x8x64xf32> to vector<8x64xf32>
    %10 = arith.addf %7, %9 : vector<8x64xf32>
    %c4 = arith.constant 4 : index
    %c0_8 = arith.constant 0 : index
    %c0_9 = arith.constant 0 : index
    %11 = vector.load %arg1[%c4, %c0_8, %c0_9] : memref<16x8x64xf32, #tpu.memory_space<vmem>>, vector<1x8x64xf32>
    %12 = vector.shape_cast %11 : vector<1x8x64xf32> to vector<8x64xf32>
    %13 = arith.addf %10, %12 : vector<8x64xf32>
    %c5 = arith.constant 5 : index
    %c0_10 = arith.constant 0 : index
    %c0_11 = arith.constant 0 : index
    %14 = vector.load %arg1[%c5, %c0_10, %c0_11] : memref<16x8x64xf32, #tpu.memory_space<vmem>>, vector<1x8x64xf32>
    %15 = vector.shape_cast %14 : vector<1x8x64xf32> to vector<8x64xf32>
    %16 = arith.addf %13, %15 : vector<8x64xf32>
    %c6 = arith.constant 6 : index
    %c0_12 = arith.constant 0 : index
    %c0_13 = arith.constant 0 : index
    %17 = vector.load %arg1[%c6, %c0_12, %c0_13] : memref<16x8x64xf32, #tpu.memory_space<vmem>>, vector<1x8x64xf32>
    %18 = vector.shape_cast %17 : vector<1x8x64xf32> to vector<8x64xf32>
    %19 = arith.addf %16, %18 : vector<8x64xf32>
    %c7 = arith.constant 7 : index
    %c0_14 = arith.constant 0 : index
    %c0_15 = arith.constant 0 : index
    %20 = vector.load %arg1[%c7, %c0_14, %c0_15] : memref<16x8x64xf32, #tpu.memory_space<vmem>>, vector<1x8x64xf32>
    %21 = vector.shape_cast %20 : vector<1x8x64xf32> to vector<8x64xf32>
    %22 = arith.addf %19, %21 : vector<8x64xf32>
    %c8 = arith.constant 8 : index
    %c0_16 = arith.constant 0 : index
    %c0_17 = arith.constant 0 : index
    %23 = vector.load %arg1[%c8, %c0_16, %c0_17] : memref<16x8x64xf32, #tpu.memory_space<vmem>>, vector<1x8x64xf32>
    %24 = vector.shape_cast %23 : vector<1x8x64xf32> to vector<8x64xf32>
    %25 = arith.addf %22, %24 : vector<8x64xf32>
    %c9 = arith.constant 9 : index
    %c0_18 = arith.constant 0 : index
    %c0_19 = arith.constant 0 : index
    %26 = vector.load %arg1[%c9, %c0_18, %c0_19] : memref<16x8x64xf32, #tpu.memory_space<vmem>>, vector<1x8x64xf32>
    %27 = vector.shape_cast %26 : vector<1x8x64xf32> to vector<8x64xf32>
    %28 = arith.addf %25, %27 : vector<8x64xf32>
    %c10 = arith.constant 10 : index
    %c0_20 = arith.constant 0 : index
    %c0_21 = arith.constant 0 : index
    %29 = vector.load %arg1[%c10, %c0_20, %c0_21] : memref<16x8x64xf32, #tpu.memory_space<vmem>>, vector<1x8x64xf32>
    %30 = vector.shape_cast %29 : vector<1x8x64xf32> to vector<8x64xf32>
    %31 = arith.addf %28, %30 : vector<8x64xf32>
    %c11 = arith.constant 11 : index
    %c0_22 = arith.constant 0 : index
    %c0_23 = arith.constant 0 : index
    %32 = vector.load %arg1[%c11, %c0_22, %c0_23] : memref<16x8x64xf32, #tpu.memory_space<vmem>>, vector<1x8x64xf32>
    %33 = vector.shape_cast %32 : vector<1x8x64xf32> to vector<8x64xf32>
    %34 = arith.addf %31, %33 : vector<8x64xf32>
    %c12 = arith.constant 12 : index
    %c0_24 = arith.constant 0 : index
    %c0_25 = arith.constant 0 : index
    %35 = vector.load %arg1[%c12, %c0_24, %c0_25] : memref<16x8x64xf32, #tpu.memory_space<vmem>>, vector<1x8x64xf32>
    %36 = vector.shape_cast %35 : vector<1x8x64xf32> to vector<8x64xf32>
    %37 = arith.addf %34, %36 : vector<8x64xf32>
    %c13 = arith.constant 13 : index
    %c0_26 = arith.constant 0 : index
    %c0_27 = arith.constant 0 : index
    %38 = vector.load %arg1[%c13, %c0_26, %c0_27] : memref<16x8x64xf32, #tpu.memory_space<vmem>>, vector<1x8x64xf32>
    %39 = vector.shape_cast %38 : vector<1x8x64xf32> to vector<8x64xf32>
    %40 = arith.addf %37, %39 : vector<8x64xf32>
    %c14 = arith.constant 14 : index
    %c0_28 = arith.constant 0 : index
    %c0_29 = arith.constant 0 : index
    %41 = vector.load %arg1[%c14, %c0_28, %c0_29] : memref<16x8x64xf32, #tpu.memory_space<vmem>>, vector<1x8x64xf32>
    %42 = vector.shape_cast %41 : vector<1x8x64xf32> to vector<8x64xf32>
    %43 = arith.addf %40, %42 : vector<8x64xf32>
    %c15 = arith.constant 15 : index
    %c0_30 = arith.constant 0 : index
    %c0_31 = arith.constant 0 : index
    %44 = vector.load %arg1[%c15, %c0_30, %c0_31] : memref<16x8x64xf32, #tpu.memory_space<vmem>>, vector<1x8x64xf32>
    %45 = vector.shape_cast %44 : vector<1x8x64xf32> to vector<8x64xf32>
    %46 = arith.addf %43, %45 : vector<8x64xf32>
    %cst = arith.constant 6.250000e-02 : f32
    %47 = vector.broadcast %cst : f32 to vector<8x64xf32>
    %48 = arith.mulf %46, %47 : vector<8x64xf32>
    %49 = arith.truncf %48 : vector<8x64xf32> to vector<8x64xbf16>
    %c0_32 = arith.constant 0 : index
    %c0_33 = arith.constant 0 : index
    %50 = vector.load %arg2[%c0_32, %c0_33] : memref<64x128xbf16, #tpu.memory_space<vmem>>, vector<64x128xbf16>
    %cst_34 = arith.constant dense<0.000000e+00> : vector<8x128xf32>
    %51 = tpu.matmul %49, %50, %cst_34 {dimension_numbers = #tpu.dot_dimension_numbers<[1], [0], [0], [1], [0, 0, 1, 1], [], []>} : vector<8x64xbf16>, vector<64x128xbf16>, vector<8x128xf32> -> vector<8x128xf32>
    %c0_35 = arith.constant 0 : index
    %c0_36 = arith.constant 0 : index
    %52 = vector.load %arg4[%c0_35, %c0_36] : memref<2x128xf32, #tpu.memory_space<vmem>>, vector<1x128xf32>
    %53 = vector.broadcast %52 : vector<1x128xf32> to vector<8x128xf32>
    %54 = arith.addf %51, %53 : vector<8x128xf32>
    %cst_37 = arith.constant 0.000000e+00 : f32
    %55 = vector.broadcast %cst_37 : f32 to vector<8x128xf32>
    %56 = arith.maximumf %54, %55 : vector<8x128xf32>
    %57 = arith.truncf %56 : vector<8x128xf32> to vector<8x128xbf16>
    %c0_38 = arith.constant 0 : index
    %c0_39 = arith.constant 0 : index
    %58 = vector.load %arg3[%c0_38, %c0_39] : memref<128x128xbf16, #tpu.memory_space<vmem>>, vector<128x128xbf16>
    %cst_40 = arith.constant dense<0.000000e+00> : vector<8x128xf32>
    %59 = tpu.matmul %57, %58, %cst_40 {dimension_numbers = #tpu.dot_dimension_numbers<[1], [0], [0], [1], [0, 0, 1, 1], [], []>} : vector<8x128xbf16>, vector<128x128xbf16>, vector<8x128xf32> -> vector<8x128xf32>
    %c1_41 = arith.constant 1 : index
    %c0_42 = arith.constant 0 : index
    %60 = vector.load %arg4[%c1_41, %c0_42] : memref<2x128xf32, #tpu.memory_space<vmem>>, vector<1x128xf32>
    %61 = vector.broadcast %60 : vector<1x128xf32> to vector<8x128xf32>
    %62 = arith.addf %59, %61 : vector<8x128xf32>
    %c0_43 = arith.constant 0 : index
    %c0_44 = arith.constant 0 : index
    %63 = vector.load %arg5[%c0_43, %c0_44] : memref<8x128xf32, #tpu.memory_space<vmem>>, vector<8x128xf32>
    tpu.vector_store %arg5[%c0_43, %c0_44], %62 {strides = array<i32>} : memref<8x128xf32, #tpu.memory_space<vmem>>, vector<8x128xf32>,
    return
  }
  func.func @transform_0(%arg0: i32) -> (i32, i32, i32) {
    %c0_i32 = arith.constant 0 : i32
    %c0_i32_0 = arith.constant 0 : i32
    %c0_i32_1 = arith.constant 0 : i32
    return %c0_i32, %arg0, %c0_i32_0 : i32, i32, i32
  }
  func.func @transform_1(%arg0: i32) -> (i32, i32) {
    %c0_i32 = arith.constant 0 : i32
    %c0_i32_0 = arith.constant 0 : i32
    %c0_i32_1 = arith.constant 0 : i32
    return %c0_i32, %c0_i32_0 : i32, i32
  }
  func.func @transform_2(%arg0: i32) -> (i32, i32) {
    %c0_i32 = arith.constant 0 : i32
    %c0_i32_0 = arith.constant 0 : i32
    %c0_i32_1 = arith.constant 0 : i32
    return %c0_i32, %c0_i32_0 : i32, i32
  }
  func.func @transform_3(%arg0: i32) -> (i32, i32) {
    %c0_i32 = arith.constant 0 : i32
    %c0_i32_0 = arith.constant 0 : i32
    %c0_i32_1 = arith.constant 0 : i32
    return %c0_i32, %c0_i32_0 : i32, i32
  }
  func.func @transform_4(%arg0: i32) -> (i32, i32) {
    %c0_i32 = arith.constant 0 : i32
    %c0_i32_0 = arith.constant 0 : i32
    return %arg0, %c0_i32 : i32, i32
  }
}

</mosaic_0001>

<llo_original>
// kernel: tpu_custom_call.1
$region0: #{tpu_custom_call.1}
  #allocation0 [shape = 'u32[]', space=smem, size = 0x4, offset = 0x4, fixed_abs, tag = 'smem constant byte address 0x4 - core index']
  #allocation1 [shape = 'u32[144,128]{1,0:T(1,128)}', space=vmem, size = 0x12000, scoped, tag = 'internal scratch']
  %s0 = inlined_call_operand.hbm [shape: f32[16,8,64], index: 0, kind: input, shape index: {}]
  %s1 = inlined_call_operand.hbm [shape: bf16[64,128], index: 1, kind: input, shape index: {}]
  %s2 = inlined_call_operand.hbm [shape: bf16[128,128], index: 2, kind: input, shape index: {}]
  %s3 = inlined_call_operand.vmem [shape: f32[2,128], index: 3, kind: input, shape index: {}]
  %s4 = inlined_call_operand.hbm [shape: f32[8,128], index: 4, kind: output, shape index: {}]
  %s5 = sld [smem:[#allocation0]]
  $region38: #{tpu_custom_call.1} parent=0
    _
  %s7 = ssub.s32 1, %s5
  %s8 = scalar_select 0, %s7, %s5
  $region1: #{tpu_custom_call.1} parent=0
    #allocation2 [shape = 'u8[65536]{0}', space=vmem, size = 0x10000, scoped, tag = 'input window, operand 0, single buffered']
    #allocation3 [shape = 's32[1]{0}', space=sflag, size = 0x4, scoped, tag = 'scoped memory for tpu_custom_call.1']
    #allocation4 [shape = 's32[1]{0}', space=sflag, size = 0x4, scoped, tag = 'scoped memory for tpu_custom_call.1']
    #allocation5 [shape = 'u8[16384]{0}', space=vmem, size = 0x4000, scoped, tag = 'input window, operand 1, single buffered']
    #allocation6 [shape = 's32[1]{0}', space=sflag, size = 0x4, scoped, tag = 'scoped memory for tpu_custom_call.1']
    #allocation7 [shape = 'u8[32768]{0}', space=vmem, size = 0x8000, scoped, tag = 'input window, operand 2, single buffered']
    #allocation8 [shape = 'u8[4096]{0}', space=vmem, size = 0x1000, scoped, tag = 'output window, operand 0, single buffered']
    %9 = vsyncpa [#allocation3], 0
    %10 = vsyncpa [#allocation6], 0
    %11 = vsyncpa [#allocation4], 0
    // Predicated region
    $region2: #{tpu_custom_call.1} parent=1 // pred_check
      _
    $region3: #{tpu_custom_call.1} parent=1 // pred_check_branch
      %13 = sbr.rel (0) target = $region5
    $region4: #{tpu_custom_call.1} parent=1 // pred_region
      %s15 = ssub.s32 2048, 2048
      %16 = vsyncadd [#allocation3], %s15
      %s17 = sshll.u32 [#allocation2], 4
      %s18 = int_to_ptr.vmem [resolvable:$true] %s17
      %23 = dma.hbm_to_vmem [thread:$0]  %s0, 2048, %s18, [#allocation3], 128, 128, 8
    $region5: #{tpu_custom_call.1} parent=1 // pred_fallthru
      _
    // Predicated region
    $region6: #{tpu_custom_call.1} parent=1 // pred_check
      _
    $region7: #{tpu_custom_call.1} parent=1 // pred_check_branch
      %25 = sbr.rel (0) target = $region9
    $region8: #{tpu_custom_call.1} parent=1 // pred_region
      %s27 = ssub.s32 512, 512
      %28 = vsyncadd [#allocation6], %s27
      %s29 = sshll.u32 [#allocation5], 4
      %s30 = int_to_ptr.vmem [resolvable:$true] %s29
      %35 = dma.hbm_to_vmem [thread:$0]  %s1, 512, %s30, [#allocation6], 64, 64, 4
    $region9: #{tpu_custom_call.1} parent=1 // pred_fallthru
      _
    // Predicated region
    $region10: #{tpu_custom_call.1} parent=1 // pred_check
      _
    $region11: #{tpu_custom_call.1} parent=1 // pred_check_branch
      %37 = sbr.rel (0) target = $region13
    $region12: #{tpu_custom_call.1} parent=1 // pred_region
      %s39 = ssub.s32 1024, 1024
      %40 = vsyncadd [#allocation6], %s39
      %s41 = sshll.u32 [#allocation7], 4
      %s42 = int_to_ptr.vmem [resolvable:$true] %s41
      %47 = dma.hbm_to_vmem [thread:$0]  %s2, 1024, %s42, [#allocation6], 64, 64, 4
    $region13: #{tpu_custom_call.1} parent=1 // pred_fallthru
      _
    // Predicated region
    $region14: #{tpu_custom_call.1} parent=1 // pred_check
      _
    $region15: #{tpu_custom_call.1} parent=1 // pred_check_branch
      %49 = sbr.rel (0) target = $region17
    $region16: #{tpu_custom_call.1} parent=1 // pred_region
      _
    $region17: #{tpu_custom_call.1} parent=1 // pred_fallthru
      _
    // Predicated region
    $region18: #{tpu_custom_call.1} parent=1 // pred_check
      _
    $region19: #{tpu_custom_call.1} parent=1 // pred_check_branch
      %51 = sbr.rel (0) target = $region21
    $region20: #{tpu_custom_call.1} parent=1 // pred_region
      %52 = dma.done [#allocation3], 2048
    $region21: #{tpu_custom_call.1} parent=1 // pred_fallthru
      _
    // Predicated region
    $region22: #{tpu_custom_call.1} parent=1 // pred_check
      _
    $region23: #{tpu_custom_call.1} parent=1 // pred_check_branch
      %54 = sbr.rel (0) target = $region25
    $region24: #{tpu_custom_call.1} parent=1 // pred_region
      %55 = dma.done [#allocation6], 512
    $region25: #{tpu_custom_call.1} parent=1 // pred_fallthru
      _
    // Predicated region
    $region26: #{tpu_custom_call.1} parent=1 // pred_check
      _
    $region27: #{tpu_custom_call.1} parent=1 // pred_check_branch
      %57 = sbr.rel (0) target = $region29
    $region28: #{tpu_custom_call.1} parent=1 // pred_region
      %58 = dma.done [#allocation6], 1024
    $region29: #{tpu_custom_call.1} parent=1 // pred_fallthru
      _
    %v60 = vld [vmem:[#allocation2] sm:$0xff]
    %s61 = scalar_lea.vmem [#allocation2], 8
    %v62 = vld [vmem:[%s61] sm:$0xff]
    %v63 = vadd.f32 %v60, %v62
    %s64 = scalar_lea.vmem [#allocation2], 16
    %v65 = vld [vmem:[%s64] sm:$0xff]
    %v66 = vadd.f32 %v63, %v65
    %s67 = scalar_lea.vmem [#allocation2], 24
    %v68 = vld [vmem:[%s67] sm:$0xff]
    %v69 = vadd.f32 %v66, %v68
    %s70 = scalar_lea.vmem [#allocation2], 32
    %v71 = vld [vmem:[%s70] sm:$0xff]
    %v72 = vadd.f32 %v69, %v71
    %s73 = scalar_lea.vmem [#allocation2], 40
    %v74 = vld [vmem:[%s73] sm:$0xff]
    %v75 = vadd.f32 %v72, %v74
    %s76 = scalar_lea.vmem [#allocation2], 48
    %v77 = vld [vmem:[%s76] sm:$0xff]
    %v78 = vadd.f32 %v75, %v77
    %s79 = scalar_lea.vmem [#allocation2], 56
    %v80 = vld [vmem:[%s79] sm:$0xff]
    %v81 = vadd.f32 %v78, %v80
    %s82 = scalar_lea.vmem [#allocation2], 64
    %v83 = vld [vmem:[%s82] sm:$0xff]
    %v84 = vadd.f32 %v81, %v83
    %s85 = scalar_lea.vmem [#allocation2], 72
    %v86 = vld [vmem:[%s85] sm:$0xff]
    %v87 = vadd.f32 %v84, %v86
    %s88 = scalar_lea.vmem [#allocation2], 80
    %v89 = vld [vmem:[%s88] sm:$0xff]
    %v90 = vadd.f32 %v87, %v89
    %s91 = scalar_lea.vmem [#allocation2], 88
    %v92 = vld [vmem:[%s91] sm:$0xff]
    %v93 = vadd.f32 %v90, %v92
    %s94 = scalar_lea.vmem [#allocation2], 96
    %v95 = vld [vmem:[%s94] sm:$0xff]
    %v96 = vadd.f32 %v93, %v95
    %s97 = scalar_lea.vmem [#allocation2], 104
    %v98 = vld [vmem:[%s97] sm:$0xff]
    %v99 = vadd.f32 %v96, %v98
    %s100 = scalar_lea.vmem [#allocation2], 112
    %v101 = vld [vmem:[%s100] sm:$0xff]
    %v102 = vadd.f32 %v99, %v101
    %s103 = scalar_lea.vmem [#allocation2], 120
    %v104 = vld [vmem:[%s103] sm:$0xff]
    %v105 = vadd.f32 %v102, %v104
    %v106 = vmul.f32 %v105, 0.0625
    %v107 = vpack.c.bf16 %v106, %v106
    %v108 = vld [vmem:[#allocation5] sm:$0xf]
    %v109 = vld [vmem:[#allocation5 + $0x4] sm:$0xf]
    %v110 = vld [vmem:[#allocation5 + $0x8] sm:$0xf]
    %v111 = vld [vmem:[#allocation5 + $0xc] sm:$0xf]
    %v112 = vld [vmem:[#allocation5 + $0x10] sm:$0xf]
    %v113 = vld [vmem:[#allocation5 + $0x14] sm:$0xf]
    %v114 = vld [vmem:[#allocation5 + $0x18] sm:$0xf]
    %v115 = vld [vmem:[#allocation5 + $0x1c] sm:$0xf]
    %v116 = vld [vmem:[%s3] sm:$0x1]
    %v117 = vlaneseq
    %v118 = vshrl.u32 %v117, 7
    %v119 = vsub.s32 0, %v118
    %v120 = vrot.slane %v116, %v119
    %v129 = vunpack.c.l.b16 %v108
    %v130 = vunpack.c.l.b16 %v109
    %v131 = vunpack.c.l.b16 %v110
    %v132 = vunpack.c.l.b16 %v111
    %v133 = vunpack.c.l.b16 %v112
    %v134 = vunpack.c.l.b16 %v113
    %v135 = vunpack.c.l.b16 %v114
    %v136 = vunpack.c.l.b16 %v115
    %v137 = vpack.c.b16 %v130, %v129
    %v138 = vpack.c.b16 %v132, %v131
    %v139 = vpack.c.b16 %v134, %v133
    %v140 = vpack.c.b16 %v136, %v135
    %vm145 = vcmask 523264
    %v147 = vsel %vm145, %v107, 0
    %149 = vmatprep.subr.bf16.mxu0 0
    %150 = vmatpush1.bf16.msra.mxu0 %v137
    %151 = vmatprep.subr.bf16.mxu0 0
    %152 = vmatpush1.bf16.msra.mxu0 %v138
    %153 = vmatprep.subr.bf16.mxu0 0
    %154 = vmatpush1.bf16.msra.mxu0 %v139
    %155 = vmatprep.subr.bf16.mxu0 0
    %156 = vmatpush1.bf16.msra.mxu0 %v140
    %157 = vmatprep.subr.bf16.mxu0 0
    %158 = vmatpush1.bf16.msra.mxu0 0
    %159 = vmatprep.subr.bf16.mxu0 0
    %160 = vmatpush1.bf16.msra.mxu0 0
    %161 = vmatprep.subr.bf16.mxu0 0
    %162 = vmatpush1.bf16.msra.mxu0 0
    %163 = vmatprep.subr.bf16.mxu0 0
    %164 = vmatpush1.bf16.msra.mxu0 0
    %165 = vmatprep.subr.bf16.mxu0 0
    %166 = vmatpush1.bf16.msra.mxu0 0
    %167 = vmatprep.subr.bf16.mxu0 0
    %168 = vmatpush1.bf16.msra.mxu0 0
    %169 = vmatprep.subr.bf16.mxu0 0
    %170 = vmatpush1.bf16.msra.mxu0 0
    %171 = vmatprep.subr.bf16.mxu0 0
    %172 = vmatpush1.bf16.msra.mxu0 0
    %173 = vmatprep.subr.bf16.mxu0 0
    %174 = vmatpush1.bf16.msra.mxu0 0
    %175 = vmatprep.subr.bf16.mxu0 0
    %176 = vmatpush1.bf16.msra.mxu0 0
    %177 = vmatprep.subr.bf16.mxu0 0
    %178 = vmatpush1.bf16.msra.mxu0 0
    %179 = vmatprep.subr.bf16.mxu0 0
    %180 = vmatpush1.bf16.msra.mxu0 0
    %181 = vmatprep.mubr.bf16.mxu0 0
    %182 = vmatmul.mubr.bf16.gmra.mrb[0].mxu0 %v147
    %v183 = vpop.f32.mrb[0].mxu0
    %v184 = vadd.f32 %v120, %v183
    %v185 = vpop.f32.mrb[0].mxu0
    %v186 = vpop.f32.mrb[0].mxu0
    %v187 = vpop.f32.mrb[0].mxu0
    %188 = vdwg.mxu0
    %v189 = vmax.f32 %v184, 0.0
    %v190 = vpack.c.bf16 %v189, %v189
    %v191 = vld [vmem:[#allocation7] sm:$0xf]
    %v192 = vld [vmem:[#allocation7 + $0x4] sm:$0xf]
    %v193 = vld [vmem:[#allocation7 + $0x8] sm:$0xf]
    %v194 = vld [vmem:[#allocation7 + $0xc] sm:$0xf]
    %v195 = vld [vmem:[#allocation7 + $0x10] sm:$0xf]
    %v196 = vld [vmem:[#allocation7 + $0x14] sm:$0xf]
    %v197 = vld [vmem:[#allocation7 + $0x18] sm:$0xf]
    %v198 = vld [vmem:[#allocation7 + $0x1c] sm:$0xf]
    %v199 = vld [vmem:[#allocation7 + $0x20] sm:$0xf]
    %v200 = vld [vmem:[#allocation7 + $0x24] sm:$0xf]
    %v201 = vld [vmem:[#allocation7 + $0x28] sm:$0xf]
    %v202 = vld [vmem:[#allocation7 + $0x2c] sm:$0xf]
    %v203 = vld [vmem:[#allocation7 + $0x30] sm:$0xf]
    %v204 = vld [vmem:[#allocation7 + $0x34] sm:$0xf]
    %v205 = vld [vmem:[#allocation7 + $0x38] sm:$0xf]
    %v206 = vld [vmem:[#allocation7 + $0x3c] sm:$0xf]
    %v207 = vld [vmem:[%s3 + $0x1] sm:$0x1]
    %v208 = vlaneseq
    %v209 = vshrl.u32 %v208, 7
    %v210 = vsub.s32 0, %v209
    %v211 = vrot.slane %v207, %v210
    %v228 = vunpack.c.l.b16 %v191
    %v229 = vunpack.c.l.b16 %v192
    %v230 = vunpack.c.l.b16 %v193
    %v231 = vunpack.c.l.b16 %v194
    %v232 = vunpack.c.l.b16 %v195
    %v233 = vunpack.c.l.b16 %v196
    %v234 = vunpack.c.l.b16 %v197
    %v235 = vunpack.c.l.b16 %v198
    %v236 = vunpack.c.l.b16 %v199
    %v237 = vunpack.c.l.b16 %v200
    %v238 = vunpack.c.l.b16 %v201
    %v239 = vunpack.c.l.b16 %v202
    %v240 = vunpack.c.l.b16 %v203
    %v241 = vunpack.c.l.b16 %v204
    %v242 = vunpack.c.l.b16 %v205
    %v243 = vunpack.c.l.b16 %v206
    %v244 = vpack.c.b16 %v229, %v228
    %v245 = vpack.c.b16 %v231, %v230
    %v246 = vpack.c.b16 %v233, %v232
    %v247 = vpack.c.b16 %v235, %v234
    %v248 = vpack.c.b16 %v237, %v236
    %v249 = vpack.c.b16 %v239, %v238
    %v250 = vpack.c.b16 %v241, %v240
    %v251 = vpack.c.b16 %v243, %v242
    %260 = vmatprep.subr.bf16.mxu0 0
    %261 = vmatpush1.bf16.msra.mxu0 %v244
    %262 = vmatprep.subr.bf16.mxu0 0
    %263 = vmatpush1.bf16.msra.mxu0 %v245
    %264 = vmatprep.subr.bf16.mxu0 0
    %265 = vmatpush1.bf16.msra.mxu0 %v246
    %266 = vmatprep.subr.bf16.mxu0 0
    %267 = vmatpush1.bf16.msra.mxu0 %v247
    %268 = vmatprep.subr.bf16.mxu0 0
    %269 = vmatpush1.bf16.msra.mxu0 %v248
    %270 = vmatprep.subr.bf16.mxu0 0
    %271 = vmatpush1.bf16.msra.mxu0 %v249
    %272 = vmatprep.subr.bf16.mxu0 0
    %273 = vmatpush1.bf16.msra.mxu0 %v250
    %274 = vmatprep.subr.bf16.mxu0 0
    %275 = vmatpush1.bf16.msra.mxu0 %v251
    %276 = vmatprep.subr.bf16.mxu0 0
    %277 = vmatpush1.bf16.msra.mxu0 0
    %278 = vmatprep.subr.bf16.mxu0 0
    %279 = vmatpush1.bf16.msra.mxu0 0
    %280 = vmatprep.subr.bf16.mxu0 0
    %281 = vmatpush1.bf16.msra.mxu0 0
    %282 = vmatprep.subr.bf16.mxu0 0
    %283 = vmatpush1.bf16.msra.mxu0 0
    %284 = vmatprep.subr.bf16.mxu0 0
    %285 = vmatpush1.bf16.msra.mxu0 0
    %286 = vmatprep.subr.bf16.mxu0 0
    %287 = vmatpush1.bf16.msra.mxu0 0
    %288 = vmatprep.subr.bf16.mxu0 0
    %289 = vmatpush1.bf16.msra.mxu0 0
    %290 = vmatprep.subr.bf16.mxu0 0
    %291 = vmatpush1.bf16.msra.mxu0 0
    %292 = vmatprep.mubr.bf16.mxu0 0
    %293 = vmatmul.mubr.bf16.gmra.mrb[0].mxu0 %v190
    %v294 = vpop.f32.mrb[0].mxu0
    %v295 = vadd.f32 %v211, %v294
    %v296 = vpop.f32.mrb[0].mxu0
    %v297 = vpop.f32.mrb[0].mxu0
    %v298 = vpop.f32.mrb[0].mxu0
    %299 = vdwg.mxu0
    %300 = vst [vmem:[#allocation8] sm:$0xff] %v295
    // Predicated region
    $region30: #{tpu_custom_call.1} parent=1 // pred_check
      _
    $region31: #{tpu_custom_call.1} parent=1 // pred_check_branch
      %302 = sbr.rel (0) target = $region33
    $region32: #{tpu_custom_call.1} parent=1 // pred_region
      %s304 = ssub.s32 128, 128
      %305 = vsyncadd [#allocation4], %s304
      %s307 = sshll.u32 [#allocation8], 4
      %s308 = int_to_ptr.vmem [resolvable:$true] %s307
      %310 = dma.vmem_to_hbm [thread:$0]  %s308, 128, %s4, [#allocation4]
    $region33: #{tpu_custom_call.1} parent=1 // pred_fallthru
      _
    // Predicated region
    $region34: #{tpu_custom_call.1} parent=1 // pred_check
      _
    $region35: #{tpu_custom_call.1} parent=1 // pred_check_branch
      %312 = sbr.rel (0) target = $region37
    $region36: #{tpu_custom_call.1} parent=1 // pred_region
      %313 = dma.done [#allocation4], 128
    $region37: #{tpu_custom_call.1} parent=1 // pred_fallthru
      _
    %314 = vsyncpa [#allocation3], 1
    %315 = vsyncpa [#allocation6], 1
    %316 = vsyncpa [#allocation4], 1

</llo_original>
